<compile_context>
chip_gen: v7x
topology: tpu7x:2x2x1
jax: 0.10.0
libtpu: 0.0.40
codegen_flags: <defaults>
</compile_context>

<pallas_src>
import jax
import jax.numpy as jnp
from jax.experimental import pallas as pl
from jax.experimental.pallas import tpu as pltpu


# Per-grid-step tile target (elements).  1 f32 input + 4 f32 outputs +
# 2 one-byte outputs, double-buffered ~= 44 B/elem -> 512K elems ~= 22.5 MiB.
_TARGET_TILE_ELEMS = 512 * 1024
_VMEM_LIMIT_BYTES = 48 * 1024 * 1024


def _elementwise_kernel(x_ref, add_ref, sub_ref, mul_ref, div_ref,
                        gt_ref, lt_ref):
    x = x_ref[...]
    add_ref[...] = x + 2.0
    sub_ref[...] = x - 2.0
    mul_ref[...] = x * 3.0
    div_ref[...] = x * 0.5                        # bit-exact for x / 2 in f32
    gt_ref[...] = (x > 1.0).astype(gt_ref.dtype)  # bool (or int8 fallback)
    lt_ref[...] = (x < 3.0).astype(lt_ref.dtype)


def _probe_bool_store():
    """Eagerly (outside any jit) check whether Mosaic accepts bool stores."""
    def k(x_ref, o_ref):
        o_ref[...] = x_ref[...] > 1.0
    try:
        out = pl.pallas_call(
            k, out_shape=jax.ShapeDtypeStruct((8, 128), jnp.bool_),
        )(jnp.zeros((8, 128), jnp.float32))
        jax.block_until_ready(out)
        return True
    except Exception:
        return False


_BOOL_STORE_OK = _probe_bool_store()
_CMP_DTYPE = jnp.bool_ if _BOOL_STORE_OK else jnp.int8


def _choose_layout(n_elems):
    """Pad-free, lane-dense (rows, W) factorization of n_elems.

    Prefers rows % 8 == 0 (clean sublane tiling); otherwise accepts any
    W | n_elems with W a multiple of 128.  Returns None if no pad-free
    lane-dense layout exists (n_elems not a multiple of 128)."""
    for w in (4096, 2048, 1024, 512, 256, 128):
        if n_elems % (8 * w) == 0:
            return n_elems // w, w
    for w in (4096, 2048, 1024, 512, 256, 128):
        if n_elems % w == 0:
            return n_elems // w, w
    return None


def _jnp_fallback(x):
    # Single fused XLA elementwise pass (roofline-optimal); used only when no
    # pad-free lane-dense layout exists.  Never pad + slice.
    # TODO(synk): handle the ragged tail in-kernel (scalar-prefetch n_elems +
    # pltpu.store masking) so this path disappears entirely.
    return (x + 2.0, x - 2.0, x * 3.0, x / 2.0, x > 1.0, x < 3.0)


def pt_module_forward(x):
    """x: float32 NCHW array. Returns the 6 outputs of PtModule.forward."""
    orig_shape = x.shape
    n_elems = x.size

    layout = _choose_layout(n_elems)
    if layout is None:
        return _jnp_fallback(x)
    rows, W = layout

    x2d = x.reshape(rows, W)                      # contiguous reshape: no copy

    # Row tile: multiple of 32 (unmasked stores for the 1-byte outputs) unless
    # the full row extent is smaller, in which case the block equals the full
    # array dim (always legal).  Ragged last blocks are handled by the cdiv
    # grid (OOB reads discarded, OOB writes clipped).
    TR = min(rows, max(32, (_TARGET_TILE_ELEMS // W) // 32 * 32))
    grid = (pl.cdiv(rows, TR),)

    blk = pl.BlockSpec((TR, W), lambda i: (i, 0))
    f32_shape = jax.ShapeDtypeStruct((rows, W), jnp.float32)
    cmp_shape = jax.ShapeDtypeStruct((rows, W), _CMP_DTYPE)

    outs = pl.pallas_call(
        _elementwise_kernel,
        out_shape=(f32_shape, f32_shape, f32_shape, f32_shape,
                   cmp_shape, cmp_shape),
        grid=grid,
        in_specs=[blk],
        out_specs=(blk, blk, blk, blk, blk, blk),
        compiler_params=pltpu.CompilerParams(
            # "parallel" is the documented multi-TensorCore sharding hint and
            # is safe (a no-op) on 1-TC chips.
            # TODO(synk): verify in an xprof trace that both v7x TensorCores
            # are active; switch to pltpu.CORE_PARALLEL if they are not.
            dimension_semantics=("parallel",),
            vmem_limit_bytes=_VMEM_LIMIT_BYTES),
        cost_estimate=pl.CostEstimate(
            flops=6 * n_elems,
            transcendentals=0,
            bytes_accessed=22 * n_elems),
    )(x2d)

    def unpack(a, dtype):
        a = a.reshape(orig_shape)                 # contiguous reshape: no copy
        return a if a.dtype == dtype else a.astype(dtype)

    return (unpack(outs[0], jnp.float32),
            unpack(outs[1], jnp.float32),
            unpack(outs[2], jnp.float32),
            unpack(outs[3], jnp.float32),
            unpack(outs[4], jnp.bool_),
            unpack(outs[5], jnp.bool_))


if __name__ == "__main__":
    key = jax.random.PRNGKey(0)
    # Small NCHW input consistent with the module's elementwise forward.
    x = jax.random.normal(key, (2, 4, 16, 16), dtype=jnp.float32) * 2.0

    fwd = jax.jit(pt_module_forward)
    results = jax.block_until_ready(fwd(x))

    # Reference check in plain JAX.
    refs = (x + 2, x - 2, x * 3, x / 2, x > 1, x < 3)
    for got, ref in zip(results, refs):
        assert got.shape == ref.shape, (got.shape, ref.shape)
        assert got.dtype == ref.dtype, (got.dtype, ref.dtype)
        if got.dtype == jnp.bool_:
            assert bool(jnp.all(got == ref))
        else:
            assert bool(jnp.allclose(got, ref, atol=1e-6))

    print("KERNEL_OK")
</pallas_src>

<mosaic_0001>
module attributes {stable_mosaic.version = 11 : i64} {
  func.func @k(%arg0: memref<8x128xf32, #tpu.memory_space<vmem>>, %arg1: memref<8x128xi32, #tpu.memory_space<vmem>>) attributes {dimension_semantics = [], scalar_prefetch = 0 : i64, scratch_operands = 0 : i64, tpu.core_type = #tpu.core_type<tc>} {
    %c0 = arith.constant 0 : index
    %c0_0 = arith.constant 0 : index
    %0 = vector.load %arg0[%c0, %c0_0] : memref<8x128xf32, #tpu.memory_space<vmem>>, vector<8x128xf32>
    %cst = arith.constant 1.000000e+00 : f32
    %1 = vector.broadcast %cst : f32 to vector<8x128xf32>
    %2 = arith.cmpf ogt, %0, %1 : vector<8x128xf32>
    %c0_1 = arith.constant 0 : index
    %c0_2 = arith.constant 0 : index
    %3 = vector.load %arg1[%c0_1, %c0_2] : memref<8x128xi32, #tpu.memory_space<vmem>>, vector<8x128xi32>
    %4 = arith.extui %2 : vector<8x128xi1> to vector<8x128xi32>
    %cst_3 = arith.constant dense<0> : vector<8x128xi32>
    %5 = arith.cmpi ne, %3, %cst_3 : vector<8x128xi32>
    tpu.vector_store %arg1[%c0_1, %c0_2], %4 {strides = array<i32>} : memref<8x128xi32, #tpu.memory_space<vmem>>, vector<8x128xi32>,
    return
  }
}

module attributes {stable_mosaic.version = 11 : i64} {
  func.func @_elementwise_kernel(%arg0: i32, %arg1: memref<8x256xf32, #tpu.memory_space<vmem>>, %arg2: memref<8x256xf32, #tpu.memory_space<vmem>>, %arg3: memref<8x256xf32, #tpu.memory_space<vmem>>, %arg4: memref<8x256xf32, #tpu.memory_space<vmem>>, %arg5: memref<8x256xf32, #tpu.memory_space<vmem>>, %arg6: memref<8x256xi8, #tpu.memory_space<vmem>>, %arg7: memref<8x256xi8, #tpu.memory_space<vmem>>) attributes {dimension_semantics = [#tpu.dimension_semantics<parallel>], iteration_bounds = array<i64: 1>, scalar_prefetch = 0 : i64, scratch_operands = 0 : i64, tpu.core_type = #tpu.core_type<tc>, window_params = [{transform_indices = @transform_0, window_bounds = array<i64: 8, 256>}, {transform_indices = @transform_1, window_bounds = array<i64: 8, 256>}, {transform_indices = @transform_2, window_bounds = array<i64: 8, 256>}, {transform_indices = @transform_3, window_bounds = array<i64: 8, 256>}, {transform_indices = @transform_4, window_bounds = array<i64: 8, 256>}, {transform_indices = @transform_5, window_bounds = array<i64: 8, 256>}, {transform_indices = @transform_6, window_bounds = array<i64: 8, 256>}]} {
    %c0 = arith.constant 0 : index
    %c0_0 = arith.constant 0 : index
    %0 = vector.load %arg1[%c0, %c0_0] : memref<8x256xf32, #tpu.memory_space<vmem>>, vector<8x256xf32>
    %cst = arith.constant 2.000000e+00 : f32
    %1 = vector.broadcast %cst : f32 to vector<8x256xf32>
    %2 = arith.addf %0, %1 : vector<8x256xf32>
    %c0_1 = arith.constant 0 : index
    %c0_2 = arith.constant 0 : index
    %3 = vector.load %arg2[%c0_1, %c0_2] : memref<8x256xf32, #tpu.memory_space<vmem>>, vector<8x256xf32>
    tpu.vector_store %arg2[%c0_1, %c0_2], %2 {strides = array<i32>} : memref<8x256xf32, #tpu.memory_space<vmem>>, vector<8x256xf32>,
    %cst_3 = arith.constant 2.000000e+00 : f32
    %4 = vector.broadcast %cst_3 : f32 to vector<8x256xf32>
    %5 = arith.subf %0, %4 : vector<8x256xf32>
    %c0_4 = arith.constant 0 : index
    %c0_5 = arith.constant 0 : index
    %6 = vector.load %arg3[%c0_4, %c0_5] : memref<8x256xf32, #tpu.memory_space<vmem>>, vector<8x256xf32>
    tpu.vector_store %arg3[%c0_4, %c0_5], %5 {strides = array<i32>} : memref<8x256xf32, #tpu.memory_space<vmem>>, vector<8x256xf32>,
    %cst_6 = arith.constant 3.000000e+00 : f32
    %7 = vector.broadcast %cst_6 : f32 to vector<8x256xf32>
    %8 = arith.mulf %0, %7 : vector<8x256xf32>
    %c0_7 = arith.constant 0 : index
    %c0_8 = arith.constant 0 : index
    %9 = vector.load %arg4[%c0_7, %c0_8] : memref<8x256xf32, #tpu.memory_space<vmem>>, vector<8x256xf32>
    tpu.vector_store %arg4[%c0_7, %c0_8], %8 {strides = array<i32>} : memref<8x256xf32, #tpu.memory_space<vmem>>, vector<8x256xf32>,
    %cst_9 = arith.constant 5.000000e-01 : f32
    %10 = vector.broadcast %cst_9 : f32 to vector<8x256xf32>
    %11 = arith.mulf %0, %10 : vector<8x256xf32>
    %c0_10 = arith.constant 0 : index
    %c0_11 = arith.constant 0 : index
    %12 = vector.load %arg5[%c0_10, %c0_11] : memref<8x256xf32, #tpu.memory_space<vmem>>, vector<8x256xf32>
    tpu.vector_store %arg5[%c0_10, %c0_11], %11 {strides = array<i32>} : memref<8x256xf32, #tpu.memory_space<vmem>>, vector<8x256xf32>,
    %cst_12 = arith.constant 1.000000e+00 : f32
    %13 = vector.broadcast %cst_12 : f32 to vector<8x256xf32>
    %14 = arith.cmpf ogt, %0, %13 : vector<8x256xf32>
    %15 = arith.extui %14 : vector<8x256xi1> to vector<8x256xi8>
    %c0_13 = arith.constant 0 : index
    %c0_14 = arith.constant 0 : index
    %16 = vector.load %arg6[%c0_13, %c0_14] : memref<8x256xi8, #tpu.memory_space<vmem>>, vector<8x256xi8>
    tpu.vector_store %arg6[%c0_13, %c0_14], %15 {strides = array<i32>} : memref<8x256xi8, #tpu.memory_space<vmem>>, vector<8x256xi8>,
    %cst_15 = arith.constant 3.000000e+00 : f32
    %17 = vector.broadcast %cst_15 : f32 to vector<8x256xf32>
    %18 = arith.cmpf olt, %0, %17 : vector<8x256xf32>
    %19 = arith.extui %18 : vector<8x256xi1> to vector<8x256xi8>
    %c0_16 = arith.constant 0 : index
    %c0_17 = arith.constant 0 : index
    %20 = vector.load %arg7[%c0_16, %c0_17] : memref<8x256xi8, #tpu.memory_space<vmem>>, vector<8x256xi8>
    tpu.vector_store %arg7[%c0_16, %c0_17], %19 {strides = array<i32>} : memref<8x256xi8, #tpu.memory_space<vmem>>, vector<8x256xi8>,
    return
  }
  func.func @transform_0(%arg0: i32) -> (i32, i32) {
    %c0_i32 = arith.constant 0 : i32
    %c0_i32_0 = arith.constant 0 : i32
    return %arg0, %c0_i32 : i32, i32
  }
  func.func @transform_1(%arg0: i32) -> (i32, i32) {
    %c0_i32 = arith.constant 0 : i32
    %c0_i32_0 = arith.constant 0 : i32
    return %arg0, %c0_i32 : i32, i32
  }
  func.func @transform_2(%arg0: i32) -> (i32, i32) {
    %c0_i32 = arith.constant 0 : i32
    %c0_i32_0 = arith.constant 0 : i32
    return %arg0, %c0_i32 : i32, i32
  }
  func.func @transform_3(%arg0: i32) -> (i32, i32) {
    %c0_i32 = arith.constant 0 : i32
    %c0_i32_0 = arith.constant 0 : i32
    return %arg0, %c0_i32 : i32, i32
  }
  func.func @transform_4(%arg0: i32) -> (i32, i32) {
    %c0_i32 = arith.constant 0 : i32
    %c0_i32_0 = arith.constant 0 : i32
    return %arg0, %c0_i32 : i32, i32
  }
  func.func @transform_5(%arg0: i32) -> (i32, i32) {
    %c0_i32 = arith.constant 0 : i32
    %c0_i32_0 = arith.constant 0 : i32
    return %arg0, %c0_i32 : i32, i32
  }
  func.func @transform_6(%arg0: i32) -> (i32, i32) {
    %c0_i32 = arith.constant 0 : i32
    %c0_i32_0 = arith.constant 0 : i32
    return %arg0, %c0_i32 : i32, i32
  }
}

</mosaic_0001>

<llo_original>
// kernel: tpu_custom_call.1
$region0: #{tpu_custom_call.1}
  #allocation0 [shape = 'u32[]', space=smem, size = 0x4, offset = 0x4, fixed_abs, tag = 'smem constant byte address 0x4 - core index']
  #allocation1 [shape = 'u32[144,128]{1,0:T(1,128)}', space=vmem, size = 0x12000, scoped, tag = 'internal scratch']
  %s0 = inlined_call_operand.hbm [shape: f32[8,128], index: 0, kind: input, shape index: {}]
  %s1 = inlined_call_operand.vmem [shape: s32[8,128], index: 1, kind: output, shape index: {}]
  %s2 = sld [smem:[#allocation0]]
  $region18: #{tpu_custom_call.1} parent=0
    _
  %s4 = ssub.s32 1, %s2
  %s5 = scalar_select 0, %s4, %s2
  $region1: #{tpu_custom_call.1} parent=0
    #allocation2 [shape = 'u8[4096]{0}', space=vmem, size = 0x1000, scoped, tag = 'input window, operand 0, single buffered']
    #allocation3 [shape = 's32[1]{0}', space=sflag, size = 0x4, scoped, tag = 'scoped memory for tpu_custom_call.1']
    %6 = vsyncpa [#allocation3], 0
    // Predicated region
    $region2: #{tpu_custom_call.1} parent=1 // pred_check
      _
    $region3: #{tpu_custom_call.1} parent=1 // pred_check_branch
      %8 = sbr.rel (0) target = $region5
    $region4: #{tpu_custom_call.1} parent=1 // pred_region
      %s10 = ssub.s32 128, 128
      %11 = vsyncadd [#allocation3], %s10
      %s13 = sshll.u32 [#allocation2], 4
      %s14 = int_to_ptr.vmem [resolvable:$true] %s13
      %16 = dma.hbm_to_vmem [thread:$0]  %s0, 128, %s14, [#allocation3]
    $region5: #{tpu_custom_call.1} parent=1 // pred_fallthru
      _
    // Predicated region
    $region6: #{tpu_custom_call.1} parent=1 // pred_check
      _
    $region7: #{tpu_custom_call.1} parent=1 // pred_check_branch
      %18 = sbr.rel (0) target = $region9
    $region8: #{tpu_custom_call.1} parent=1 // pred_region
      %19 = dma.done [#allocation3], 128
    $region9: #{tpu_custom_call.1} parent=1 // pred_fallthru
      _
    %v20 = vld [vmem:[#allocation2] sm:$0xff]
    %vm21 = vcmp.gt.f32.partialorder %v20, 1.0
    %v22 = vsel %vm21, 1, 0
    %23 = vst [vmem:[%s1] sm:$0xff] %v22
    // Predicated region
    $region10: #{tpu_custom_call.1} parent=1 // pred_check
      _
    $region11: #{tpu_custom_call.1} parent=1 // pred_check_branch
      %25 = sbr.rel (0) target = $region13
    $region12: #{tpu_custom_call.1} parent=1 // pred_region
      _
    $region13: #{tpu_custom_call.1} parent=1 // pred_fallthru
      _
    // Predicated region
    $region14: #{tpu_custom_call.1} parent=1 // pred_check
      _
    $region15: #{tpu_custom_call.1} parent=1 // pred_check_branch
      %27 = sbr.rel (0) target = $region17
    $region16: #{tpu_custom_call.1} parent=1 // pred_region
      _
    $region17: #{tpu_custom_call.1} parent=1 // pred_fallthru
      _
    %28 = vsyncpa [#allocation3], 1

// kernel: pt_module_forward.1
$region0: #{pt_module_forward.1}
  #allocation0 [shape = 'u32[]', space=smem, size = 0x4, offset = 0x4, fixed_abs, tag = 'smem constant byte address 0x4 - core index']
  #allocation1 [shape = 'u32[144,128]{1,0:T(1,128)}', space=vmem, size = 0x12000, scoped, tag = 'internal scratch']
  %s0 = inlined_call_operand.vmem [shape: f32[8,256], index: 0, kind: input, shape index: {}]
  %s1 = inlined_call_operand.vmem [shape: f32[8,256], index: 1, kind: output, shape index: {0}]
  %s2 = inlined_call_operand.vmem [shape: f32[8,256], index: 2, kind: output, shape index: {1}]
  %s3 = inlined_call_operand.vmem [shape: f32[8,256], index: 3, kind: output, shape index: {2}]
  %s4 = inlined_call_operand.vmem [shape: f32[8,256], index: 4, kind: output, shape index: {3}]
  %s5 = inlined_call_operand.vmem [shape: s8[8,256], index: 5, kind: output, shape index: {4}]
  %s6 = inlined_call_operand.vmem [shape: s8[8,256], index: 6, kind: output, shape index: {5}]
  %7 = xla_tuple %s1, %s2, %s3, %s4, %s5, %s6
  %s8 = sld [smem:[#allocation0]]
  $region54: #{pt_module_forward.1} parent=0
    _
  %s10 = ssub.s32 1, %s8
  %s11 = scalar_select 0, %s10, %s8
  // Predicated region
  $region2: #{pt_module_forward.1} parent=0 // pred_check
    _
  $region3: #{pt_module_forward.1} parent=0 // pred_check_branch
    %13 = sbr.rel (0) target = $region5
  $region4: #{pt_module_forward.1} parent=0 // pred_region
    _
  $region5: #{pt_module_forward.1} parent=0 // pred_fallthru
    _
  %v16 = vld [vmem:[%s0] sm:$0xff]
  %v17 = vld [vmem:[%s0 + $0x8] sm:$0xff]
  %v18 = vadd.f32 %v16, 2.0
  %v19 = vadd.f32 %v17, 2.0
  %20 = vst [vmem:[%s1] sm:$0xff] %v18
  %21 = vst [vmem:[%s1 + $0x8] sm:$0xff] %v19
  %v22 = vsub.f32 %v16, 2.0
  %v23 = vsub.f32 %v17, 2.0
  %24 = vst [vmem:[%s2] sm:$0xff] %v22
  %25 = vst [vmem:[%s2 + $0x8] sm:$0xff] %v23
  %v26 = vmul.f32 %v16, 3.0
  %v27 = vmul.f32 %v17, 3.0
  %28 = vst [vmem:[%s3] sm:$0xff] %v26
  %29 = vst [vmem:[%s3 + $0x8] sm:$0xff] %v27
  %v30 = vmul.f32 %v16, 0.5
  %v31 = vmul.f32 %v17, 0.5
  %32 = vst [vmem:[%s4] sm:$0xff] %v30
  %33 = vst [vmem:[%s4 + $0x8] sm:$0xff] %v31
  %vm34 = vcmp.gt.f32.partialorder %v16, 1.0
  %vm35 = vcmp.gt.f32.partialorder %v17, 1.0
  %vm36 = vmpackc.low %vm34, %vm34
  %vm37 = vmpackc.even %vm36, %vm36
  %vm38 = vmpackc.low %vm35, %vm35
  %vm39 = vmpackc.even %vm38, %vm38
  %v40 = vsel %vm37, 16843009, 0
  %v41 = vsel %vm39, 16843009, 0
  %v42 = vunpack.c.0.s8 %v40
  %v43 = vunpack.c.0.s8 %v41
  %v44 = vpack.c.b16 %v43, %v42
  %v45 = vpack.c.b8 %v44, %v44
  %46 = vst [vmem:[%s5] sm:$0xf] %v45
  %vm47 = vcmp.lt.f32.partialorder %v16, 3.0
  %vm48 = vcmp.lt.f32.partialorder %v17, 3.0
  %vm49 = vmpackc.low %vm47, %vm47
  %vm50 = vmpackc.even %vm49, %vm49
  %vm51 = vmpackc.low %vm48, %vm48
  %vm52 = vmpackc.even %vm51, %vm51
  %v53 = vsel %vm50, 16843009, 0
  %v54 = vsel %vm52, 16843009, 0
  %v55 = vunpack.c.0.s8 %v53
  %v56 = vunpack.c.0.s8 %v54
  %v57 = vpack.c.b16 %v56, %v55
  %v58 = vpack.c.b8 %v57, %v57
  %59 = vst [vmem:[%s6] sm:$0xf] %v58
  // Predicated region
  $region6: #{pt_module_forward.1} parent=0 // pred_check
    _
  $region7: #{pt_module_forward.1} parent=0 // pred_check_branch
    %61 = sbr.rel (0) target = $region9
  $region8: #{pt_module_forward.1} parent=0 // pred_region
    _
  $region9: #{pt_module_forward.1} parent=0 // pred_fallthru
    _
  // Predicated region
  $region10: #{pt_module_forward.1} parent=0 // pred_check
    _
  $region11: #{pt_module_forward.1} parent=0 // pred_check_branch
    %63 = sbr.rel (0) target = $region13
  $region12: #{pt_module_forward.1} parent=0 // pred_region
    _
  $region13: #{pt_module_forward.1} parent=0 // pred_fallthru
    _
  // Predicated region
  $region14: #{pt_module_forward.1} parent=0 // pred_check
    _
  $region15: #{pt_module_forward.1} parent=0 // pred_check_branch
    %65 = sbr.rel (0) target = $region17
  $region16: #{pt_module_forward.1} parent=0 // pred_region
    _
  $region17: #{pt_module_forward.1} parent=0 // pred_fallthru
    _
  // Predicated region
  $region18: #{pt_module_forward.1} parent=0 // pred_check
    _
  $region19: #{pt_module_forward.1} parent=0 // pred_check_branch
    %67 = sbr.rel (0) target = $region21
  $region20: #{pt_module_forward.1} parent=0 // pred_region
    _
  $region21: #{pt_module_forward.1} parent=0 // pred_fallthru
    _
  // Predicated region
  $region22: #{pt_module_forward.1} parent=0 // pred_check
    _
  $region23: #{pt_module_forward.1} parent=0 // pred_check_branch
    %69 = sbr.rel (0) target = $region25
  $region24: #{pt_module_forward.1} parent=0 // pred_region
    _
  $region25: #{pt_module_forward.1} parent=0 // pred_fallthru
    _
  // Predicated region
  $region26: #{pt_module_forward.1} parent=0 // pred_check
    _
  $region27: #{pt_module_forward.1} parent=0 // pred_check_branch
    %71 = sbr.rel (0) target = $region29
  $region28: #{pt_module_forward.1} parent=0 // pred_region
    _
  $region29: #{pt_module_forward.1} parent=0 // pred_fallthru
    _
  // Predicated region
  $region30: #{pt_module_forward.1} parent=0 // pred_check
    _
  $region31: #{pt_module_forward.1} parent=0 // pred_check_branch
    %73 = sbr.rel (0) target = $region33
  $region32: #{pt_module_forward.1} parent=0 // pred_region
    _
  $region33: #{pt_module_forward.1} parent=0 // pred_fallthru
    _
  // Predicated region
  $region34: #{pt_module_forward.1} parent=0 // pred_check
    _
  $region35: #{pt_module_forward.1} parent=0 // pred_check_branch
    %75 = sbr.rel (0) target = $region37
  $region36: #{pt_module_forward.1} parent=0 // pred_region
    _
  $region37: #{pt_module_forward.1} parent=0 // pred_fallthru
    _
  // Predicated region
  $region38: #{pt_module_forward.1} parent=0 // pred_check
    _
  $region39: #{pt_module_forward.1} parent=0 // pred_check_branch
    %77 = sbr.rel (0) target = $region41
  $region40: #{pt_module_forward.1} parent=0 // pred_region
    _
  $region41: #{pt_module_forward.1} parent=0 // pred_fallthru
    _
  // Predicated region
  $region42: #{pt_module_forward.1} parent=0 // pred_check
    _
  $region43: #{pt_module_forward.1} parent=0 // pred_check_branch
    %79 = sbr.rel (0) target = $region45
  $region44: #{pt_module_forward.1} parent=0 // pred_region
    _
  $region45: #{pt_module_forward.1} parent=0 // pred_fallthru
    _
  // Predicated region
  $region46: #{pt_module_forward.1} parent=0 // pred_check
    _
  $region47: #{pt_module_forward.1} parent=0 // pred_check_branch
    %81 = sbr.rel (0) target = $region49
  $region48: #{pt_module_forward.1} parent=0 // pred_region
    _
  $region49: #{pt_module_forward.1} parent=0 // pred_fallthru
    _
  // Predicated region
  $region50: #{pt_module_forward.1} parent=0 // pred_check
    _
  $region51: #{pt_module_forward.1} parent=0 // pred_check_branch
    %83 = sbr.rel (0) target = $region53
  $region52: #{pt_module_forward.1} parent=0 // pred_region
    _
  $region53: #{pt_module_forward.1} parent=0 // pred_fallthru
    _

</llo_original>
